<compile_context>
chip_gen: v5e
topology: v5e:2x2
jax: 0.10.0
libtpu: 0.0.40
codegen_flags: <defaults>
</compile_context>

<pallas_src>
import math
from functools import partial

import jax
import jax.numpy as jnp
from jax import lax
from jax.experimental import pallas as pl
from jax.experimental.pallas import tpu as pltpu


def _round_up(x, m):
    return (x + m - 1) // m * m


def _vmem_capacity_bytes():
    """Physical VMEM of the current chip; conservative fallback if unknown."""
    try:
        return int(pltpu.get_tpu_info().vmem_capacity_bytes)
    except Exception:
        return 64 * 1024 * 1024          # v7x-sized fallback (smallest current gen)


def _median3x3_kernel(cur_ref, halo_ref, o_ref, *, c_stride, out_lanes):
    """3x3 median on a (rows, W*C) fused-lane tile, left-aligned window.

    cur_ref:  (th, Lk)  rows [i*th, i*th+th) of the (lane-padded) image
    halo_ref: (q,  Lk)  rows starting at (i+1)*th (clamped; only rows 0..1 used)
    o_ref:    (th, Lo)  o[r, w*C+c] = median over rows r..r+2, cols w..w+2
    """
    th, lanes = cur_ref.shape

    r0 = cur_ref[...]
    h0 = halo_ref[0:1, :]
    h1 = halo_ref[1:2, :]

    row = lax.broadcasted_iota(jnp.int32, (th, lanes), 0)
    is_last = row == th - 1

    # Vertical taps r+1 / r+2: sublane roll (XLU) + patch the wrapped last row
    # with the halo rows.  pltpu.roll matches jnp.roll: out[j] = x[(j - s) % n].
    r1 = jnp.where(is_last, h0, pltpu.roll(r0, th - 1, axis=0))
    r2 = jnp.where(is_last, h1, pltpu.roll(r1, th - 1, axis=0))

    # Per-column 3-sort of the vertical taps (6 min/max on the VPU).
    mn = jnp.minimum(r0, r1)
    mx = jnp.maximum(r0, r1)
    lo = jnp.minimum(mn, r2)                       # column min
    md = jnp.maximum(mn, jnp.minimum(mx, r2))      # column median
    hi = jnp.maximum(mx, r2)                       # column max

    # Horizontal taps at lanes l + C and l + 2C via lane rolls (XLU).  Lanes that
    # wrap around land at columns >= Wo, which are never written to the output.
    def taps(v):
        return (pltpu.roll(v, lanes - c_stride, axis=1),
                pltpu.roll(v, lanes - 2 * c_stride, axis=1))

    lo1, lo2 = taps(lo)
    max_lo = jnp.maximum(jnp.maximum(lo1, lo2), lo)
    hi1, hi2 = taps(hi)
    min_hi = jnp.minimum(jnp.minimum(hi1, hi2), hi)
    md1, md2 = taps(md)
    med_md = jnp.maximum(jnp.minimum(md1, md2),
                         jnp.minimum(jnp.maximum(md1, md2), md))

    # median9 = med3(max of column mins, med3 of column medians, min of column maxs)
    f_mn = jnp.minimum(max_lo, med_md)
    f_mx = jnp.maximum(max_lo, med_md)
    res = jnp.maximum(f_mn, jnp.minimum(f_mx, min_hi))

    o_ref[...] = res[:, :out_lanes]


def median_pool2d(x_hwc, kernel_size=3, stride=1, padding=0, same=False):
    """Matches MedianPool2d.forward for kernel_size=3, stride=1.

    x_hwc: (H, W, C) array.  Returns {'image': (H_out, W_out, C) array}.
    `padding` is an int or a 4-tuple (left, right, top, bottom) as in F.pad.
    """
    # TODO(synk): general kernel_size / stride (the module defaults are implemented).
    assert kernel_size == 3 and stride == 1, "kernel implements the module defaults"

    ih, iw, C = x_hwc.shape

    # --- padding logic (mirrors MedianPool2d._padding) -------------------------
    if same:
        ph = max(3 - stride, 0) if ih % stride == 0 else max(3 - ih % stride, 0)
        pw = max(3 - stride, 0) if iw % stride == 0 else max(3 - iw % stride, 0)
        pad_l = pw // 2
        pad_r = pw - pad_l
        pad_t = ph // 2
        pad_b = ph - pad_t
    else:
        if isinstance(padding, int):
            pad_l = pad_r = pad_t = pad_b = padding
        else:
            pad_l, pad_r, pad_t, pad_b = padding       # (l, r, t, b), F.pad ordering
    if pad_l or pad_r or pad_t or pad_b:
        assert max(pad_t, pad_b) < ih and max(pad_l, pad_r) < iw, \
            "reflect padding requires pad < dim size"
        x_hwc = jnp.pad(x_hwc, ((pad_t, pad_b), (pad_l, pad_r), (0, 0)), mode='reflect')

    Hp, Wp, _ = x_hwc.shape
    Ho, Wo = Hp - 2, Wp - 2
    assert Ho >= 1 and Wo >= 1, "image too small for a 3x3 median"

    dtype = x_hwc.dtype
    itemsize = jnp.dtype(dtype).itemsize
    q = max(8, (8 * 4) // itemsize)                    # sublane quantum: 8 / 16 / 32

    # --- lanes: fuse (W, C); pad W only if W*C is not already 128-aligned ------
    lane_quantum = 128 // math.gcd(C, 128)
    Wk = _round_up(Wp, lane_quantum)
    Lk = Wk * C
    Lo = Wo * C
    if Wk > Wp:
        # Padded lanes never feed valid outputs (they only sit past column Wo).
        x_hwc = jnp.pad(x_hwc, ((0, 0), (0, Wk - Wp), (0, 0)), mode='edge')
    x2 = x_hwc.reshape(Hp, Lk)

    # --- row tiling: size by VMEM capacity; >= 2 tiles whenever possible -------
    cap = _vmem_capacity_bytes()
    if cap >= 128 * 1024 * 1024:                       # v5e / v6e: lots of headroom
        vmem_limit, tile_budget = 96 * 1024 * 1024, 4 * 1024 * 1024
    else:                                              # v7x (64 MiB physical) / unknown
        vmem_limit, tile_budget = 32 * 1024 * 1024, 3 * 1024 * 1024 // 2
    row_bytes = Lk * itemsize
    th = max(q, tile_budget // row_bytes // q * q)
    th = min(th, _round_up(Ho, q))
    if Ho > q and pl.cdiv(Ho, th) == 1:
        th = _round_up(pl.cdiv(Ho, 2), q)              # 2 tiles -> both TCs on v7x
    nH = pl.cdiv(Ho, th)
    nb = th // q
    max_halo_blk = pl.cdiv(Hp, q) - 1                  # clamp: halo block stays in bounds

    kernel = partial(_median3x3_kernel, c_stride=C, out_lanes=Lo)
    out2 = pl.pallas_call(
        kernel,
        out_shape=jax.ShapeDtypeStruct((Ho, Lo), dtype),
        grid=(nH,),
        in_specs=[
            pl.BlockSpec((th, Lk), lambda i: (i, 0)),                  # current rows
            pl.BlockSpec((q, Lk),
                         lambda i: (jnp.minimum(i * nb + nb, max_halo_blk), 0)),  # halo
        ],
        out_specs=pl.BlockSpec((th, Lo), lambda i: (i, 0)),
        compiler_params=pltpu.CompilerParams(
            dimension_semantics=("parallel",),
            vmem_limit_bytes=vmem_limit,
        ),
        cost_estimate=pl.CostEstimate(
            flops=22 * Ho * Lk,
            transcendentals=0,
            bytes_accessed=(Hp * Lk + Ho * Lo) * itemsize,
        ),
    )(x2, x2)

    # The output array is already exactly (Ho, Wo*C): no crop pass, free reshape.
    return {'image': out2.reshape(Ho, Wo, C)}


def _median_pool2d_ref(x_hwc):
    """Pure-JAX reference (same semantics as the PyTorch module, padding=0)."""
    H, W, C = x_hwc.shape
    Ho, Wo = H - 2, W - 2
    taps = jnp.stack([x_hwc[dy:dy + Ho, dx:dx + Wo, :]
                      for dy in range(3) for dx in range(3)], axis=-1)
    return jnp.sort(taps, axis=-1)[..., 4]      # 5th smallest of 9 == torch.median


if __name__ == "__main__":
    key = jax.random.PRNGKey(0)
    k1, k2 = jax.random.split(key)

    # Case 1: (H, W, C) = (16, 16, 4) -- lane padding, 2 row tiles, halo + clamp,
    # partial output block.
    x = jax.random.uniform(k1, (16, 16, 4), dtype=jnp.float32)
    out = jax.block_until_ready(median_pool2d(x)['image'])
    assert out.shape == (14, 14, 4), out.shape
    assert jnp.allclose(out, _median_pool2d_ref(x)), "mismatch vs reference (case 1)"

    # Case 2: odd sizes / C=3 -- heavy lane padding, partial input blocks,
    # clamped halo on the last tile.
    x2 = jax.random.uniform(k2, (21, 13, 3), dtype=jnp.float32)
    out2 = jax.block_until_ready(median_pool2d(x2)['image'])
    assert out2.shape == (19, 11, 3), out2.shape
    assert jnp.allclose(out2, _median_pool2d_ref(x2)), "mismatch vs reference (case 2)"

    print("KERNEL_OK")
</pallas_src>

<mosaic_0001>
module attributes {stable_mosaic.version = 11 : i64} {
  func.func @_median3x3_kernel(%arg0: i32, %arg1: memref<8x128xf32, #tpu.memory_space<vmem>>, %arg2: memref<8x128xf32, #tpu.memory_space<vmem>>, %arg3: memref<8x56xf32, #tpu.memory_space<vmem>>) attributes {dimension_semantics = [#tpu.dimension_semantics<parallel>], iteration_bounds = array<i64: 2>, scalar_prefetch = 0 : i64, scratch_operands = 0 : i64, tpu.core_type = #tpu.core_type<tc>, window_params = [{transform_indices = @transform_0, window_bounds = array<i64: 8, 128>}, {transform_indices = @transform_1, window_bounds = array<i64: 8, 128>}, {transform_indices = @transform_2, window_bounds = array<i64: 8, 56>}]} {
    %c0 = arith.constant 0 : index
    %c0_0 = arith.constant 0 : index
    %0 = vector.load %arg1[%c0, %c0_0] : memref<8x128xf32, #tpu.memory_space<vmem>>, vector<8x128xf32>
    %c0_1 = arith.constant 0 : index
    %c0_2 = arith.constant 0 : index
    %1 = vector.load %arg2[%c0_1, %c0_2] : memref<8x128xf32, #tpu.memory_space<vmem>>, vector<1x128xf32>
    %c1 = arith.constant 1 : index
    %c0_3 = arith.constant 0 : index
    %2 = vector.load %arg2[%c1, %c0_3] : memref<8x128xf32, #tpu.memory_space<vmem>>, vector<1x128xf32>
    %3 = tpu.iota {dimensions = array<i32: 0>} : vector<8x128xi32>
    %c7_i32 = arith.constant 7 : i32
    %4 = vector.broadcast %c7_i32 : i32 to vector<8x128xi32>
    %5 = arith.cmpi eq, %3, %4 : vector<8x128xi32>
    %c7_i32_4 = arith.constant 7 : i32
    %6 = tpu.dynamic_rotate %0 by %c7_i32_4 dim 0 : vector<8x128xf32>, i32 -> vector<8x128xf32>
    %7 = vector.shape_cast %1 : vector<1x128xf32> to vector<1x128xf32>
    %8 = vector.broadcast %7 : vector<1x128xf32> to vector<8x128xf32>
    %9 = arith.select %5, %8, %6 : vector<8x128xi1>, vector<8x128xf32>
    %c7_i32_5 = arith.constant 7 : i32
    %10 = tpu.dynamic_rotate %9 by %c7_i32_5 dim 0 : vector<8x128xf32>, i32 -> vector<8x128xf32>
    %11 = vector.shape_cast %2 : vector<1x128xf32> to vector<1x128xf32>
    %12 = vector.broadcast %11 : vector<1x128xf32> to vector<8x128xf32>
    %13 = arith.select %5, %12, %10 : vector<8x128xi1>, vector<8x128xf32>
    %14 = arith.minimumf %0, %9 : vector<8x128xf32>
    %15 = arith.maximumf %0, %9 : vector<8x128xf32>
    %16 = arith.minimumf %14, %13 : vector<8x128xf32>
    %17 = arith.minimumf %15, %13 : vector<8x128xf32>
    %18 = arith.maximumf %14, %17 : vector<8x128xf32>
    %19 = arith.maximumf %15, %13 : vector<8x128xf32>
    %c124_i32 = arith.constant 124 : i32
    %20 = tpu.dynamic_rotate %16 by %c124_i32 dim 1 : vector<8x128xf32>, i32 -> vector<8x128xf32>
    %c120_i32 = arith.constant 120 : i32
    %21 = tpu.dynamic_rotate %16 by %c120_i32 dim 1 : vector<8x128xf32>, i32 -> vector<8x128xf32>
    %22 = arith.maximumf %20, %21 : vector<8x128xf32>
    %23 = arith.maximumf %22, %16 : vector<8x128xf32>
    %c124_i32_6 = arith.constant 124 : i32
    %24 = tpu.dynamic_rotate %19 by %c124_i32_6 dim 1 : vector<8x128xf32>, i32 -> vector<8x128xf32>
    %c120_i32_7 = arith.constant 120 : i32
    %25 = tpu.dynamic_rotate %19 by %c120_i32_7 dim 1 : vector<8x128xf32>, i32 -> vector<8x128xf32>
    %26 = arith.minimumf %24, %25 : vector<8x128xf32>
    %27 = arith.minimumf %26, %19 : vector<8x128xf32>
    %c124_i32_8 = arith.constant 124 : i32
    %28 = tpu.dynamic_rotate %18 by %c124_i32_8 dim 1 : vector<8x128xf32>, i32 -> vector<8x128xf32>
    %c120_i32_9 = arith.constant 120 : i32
    %29 = tpu.dynamic_rotate %18 by %c120_i32_9 dim 1 : vector<8x128xf32>, i32 -> vector<8x128xf32>
    %30 = arith.minimumf %28, %29 : vector<8x128xf32>
    %31 = arith.maximumf %28, %29 : vector<8x128xf32>
    %32 = arith.minimumf %31, %18 : vector<8x128xf32>
    %33 = arith.maximumf %30, %32 : vector<8x128xf32>
    %34 = arith.minimumf %23, %33 : vector<8x128xf32>
    %35 = arith.maximumf %23, %33 : vector<8x128xf32>
    %36 = arith.minimumf %35, %27 : vector<8x128xf32>
    %37 = arith.maximumf %34, %36 : vector<8x128xf32>
    %38 = vector.extract_strided_slice %37 {offsets = [0, 0], sizes = [8, 56], strides = [1, 1]} : vector<8x128xf32> to vector<8x56xf32>
    %c0_10 = arith.constant 0 : index
    %c0_11 = arith.constant 0 : index
    %39 = vector.load %arg3[%c0_10, %c0_11] : memref<8x56xf32, #tpu.memory_space<vmem>>, vector<8x56xf32>
    tpu.vector_store %arg3[%c0_10, %c0_11], %38 {strides = array<i32>} : memref<8x56xf32, #tpu.memory_space<vmem>>, vector<8x56xf32>,
    return
  }
  func.func @transform_0(%arg0: i32) -> (i32, i32) {
    %c0_i32 = arith.constant 0 : i32
    %c0_i32_0 = arith.constant 0 : i32
    return %arg0, %c0_i32 : i32, i32
  }
  func.func @transform_1(%arg0: i32) -> (i32, i32) {
    %c1_i32 = arith.constant 1 : i32
    %0 = arith.muli %arg0, %c1_i32 : i32
    %c1_i32_0 = arith.constant 1 : i32
    %1 = arith.addi %0, %c1_i32_0 : i32
    %c1_i32_1 = arith.constant 1 : i32
    %2 = arith.minsi %1, %c1_i32_1 : i32
    %c0_i32 = arith.constant 0 : i32
    %c0_i32_2 = arith.constant 0 : i32
    return %2, %c0_i32 : i32, i32
  }
  func.func @transform_2(%arg0: i32) -> (i32, i32) {
    %c0_i32 = arith.constant 0 : i32
    %c0_i32_0 = arith.constant 0 : i32
    return %arg0, %c0_i32 : i32, i32
  }
}

</mosaic_0001>

<llo_original>
// kernel: tpu_custom_call.1
$region0: #{tpu_custom_call.1}
  #allocation0 [shape = 'u32[]', space=smem, size = 0x4, offset = 0x4, fixed_abs, tag = 'smem constant byte address 0x4 - core index']
  #allocation1 [shape = 'u32[72,128]{1,0:T(1,128)}', space=vmem, size = 0x9000, scoped, tag = 'internal scratch']
  %s0 = inlined_call_operand.hbm [shape: f32[16,128], index: 0, kind: input, shape index: {}]
  %s1 = inlined_call_operand.hbm [shape: f32[16,128], index: 1, kind: input, shape index: {}]
  %s2 = inlined_call_operand.hbm [shape: f32[14,56], index: 2, kind: output, shape index: {}]
  %s3 = sld [smem:[#allocation0]]
  $region49: #{tpu_custom_call.1} parent=0
    _
  %s5 = ssub.s32 1, %s3
  %s6 = scalar_select 0, %s5, %s3
  $region1: #{tpu_custom_call.1} parent=0
    #allocation2 [shape = 'u8[8192]{0}', space=vmem, size = 0x2000, scoped, tag = 'input window, operand 0']
    #allocation3 [shape = 's32[2]{0}', space=sflag, size = 0x8, scoped, tag = 'scoped memory for tpu_custom_call.1']
    #allocation4 [shape = 's32[2]{0}', space=sflag, size = 0x8, scoped, tag = 'scoped memory for tpu_custom_call.1']
    #allocation5 [shape = 'u8[8192]{0}', space=vmem, size = 0x2000, scoped, tag = 'input window, operand 1']
    #allocation6 [shape = 's32[2]{0}', space=sflag, size = 0x8, scoped, tag = 'scoped memory for tpu_custom_call.1']
    #allocation7 [shape = 'u8[8192]{0}', space=vmem, size = 0x2000, scoped, tag = 'output window, operand 0']
    %7 = vsyncpa [#allocation3], 0
    %s8 = scalar_lea.sflag [#allocation3], 1
    %9 = vsyncpa %s8, 0
    %10 = vsyncpa [#allocation6], 0
    %s11 = scalar_lea.sflag [#allocation6], 1
    %12 = vsyncpa %s11, 0
    %13 = vsyncpa [#allocation4], 0
    %s14 = scalar_lea.sflag [#allocation4], 1
    %15 = vsyncpa %s14, 0
    loop: start=0, step=1, limit=4
    $region2: #{tpu_custom_call.1} parent=1 // loop_pre_header
      _
    $region3: #{tpu_custom_call.1} parent=1 // loop_header
      %s17 = sphi 0, %s21
      %p18 = scmp.ge.s32.totalorder %s17, 4
      %s27 = sphi 0, %s29
      %s30 = sphi 0, %s27
      %s31 = sphi 0, %s30
      %s47 = sphi 0, %s31
      %s59 = sphi 0, %s61
      %s62 = sphi 0, %s59
      %s63 = sphi 0, %s62
      %s79 = sphi 0, %s63
      %s85 = sphi 0, %s87
      %s88 = sphi 0, %s85
      %s89 = sphi 0, %s88
      %s105 = sphi 0, %s89
    $region4: #{tpu_custom_call.1} parent=1 // loop_header_branch
      %20 = sbr.rel (%p18) target = $region8
    $region5: #{tpu_custom_call.1} parent=1 // loop_body
      %s22 = ssub.s32 %s17, 1
      %s23 = ssub.s32 %s17, 2
      %s24 = sadd.s32 %s17, 1
      %s25 = ssub.s32 %s17, %s24
      %p26 = scmp.eq.s32.totalorder %s25, 0
      %s28 = sadd.s32 %s27, 1
      %s29 = scalar_select %p26, %s27, %s28
      %p32 = pneg %p26
      %p33 = scmp.eq.s32.totalorder %s17, 1
      %p34 = por %p32, %p33
      %p35 = scmp.ne.s32.totalorder %s27, %s30
      %p36 = scmp.eq.s32.totalorder %s17, 0
      %p37 = por %p35, %p36
      %p38 = scmp.ne.s32.totalorder %s27, %s30
      %p39 = scmp.eq.s32.totalorder %s22, 1
      %p40 = por %p38, %p39
      %p41 = scmp.ne.s32.totalorder %s30, %s31
      %p42 = scmp.eq.s32.totalorder %s22, 0
      %p43 = por %p41, %p42
      %p44 = scmp.ne.s32.totalorder %s30, %s31
      %p45 = scmp.eq.s32.totalorder %s23, 1
      %p46 = por %p44, %p45
      %p48 = scmp.ne.s32.totalorder %s31, %s47
      %p49 = scmp.eq.s32.totalorder %s23, 0
      %p50 = por %p48, %p49
      %s51 = sadd.s32 %s17, 1
      %p52 = scmp.lt.s32.totalorder %s51, 1
      %s53 = scalar_select %p52, %s51, 1
      %s54 = sadd.s32 %s24, 1
      %p55 = scmp.lt.s32.totalorder %s54, 1
      %s56 = scalar_select %p55, %s54, 1
      %s57 = ssub.s32 %s53, %s56
      %p58 = scmp.eq.s32.totalorder %s57, 0
      %s60 = sadd.s32 %s59, 1
      %s61 = scalar_select %p58, %s59, %s60
      %p64 = pneg %p58
      %p65 = scmp.eq.s32.totalorder %s17, 1
      %p66 = por %p64, %p65
      %p67 = scmp.ne.s32.totalorder %s59, %s62
      %p68 = scmp.eq.s32.totalorder %s17, 0
      %p69 = por %p67, %p68
      %p70 = scmp.ne.s32.totalorder %s59, %s62
      %p71 = scmp.eq.s32.totalorder %s22, 1
      %p72 = por %p70, %p71
      %p73 = scmp.ne.s32.totalorder %s62, %s63
      %p74 = scmp.eq.s32.totalorder %s22, 0
      %p75 = por %p73, %p74
      %p76 = scmp.ne.s32.totalorder %s62, %s63
      %p77 = scmp.eq.s32.totalorder %s23, 1
      %p78 = por %p76, %p77
      %p80 = scmp.ne.s32.totalorder %s63, %s79
      %p81 = scmp.eq.s32.totalorder %s23, 0
      %p82 = por %p80, %p81
      %s83 = ssub.s32 %s17, %s24
      %p84 = scmp.eq.s32.totalorder %s83, 0
      %s86 = sadd.s32 %s85, 1
      %s87 = scalar_select %p84, %s85, %s86
      %p90 = pneg %p84
      %p91 = scmp.eq.s32.totalorder %s17, 1
      %p92 = por %p90, %p91
      %p93 = scmp.ne.s32.totalorder %s85, %s88
      %p94 = scmp.eq.s32.totalorder %s17, 0
      %p95 = por %p93, %p94
      %p96 = scmp.ne.s32.totalorder %s85, %s88
      %p97 = scmp.eq.s32.totalorder %s22, 1
      %p98 = por %p96, %p97
      %p99 = scmp.ne.s32.totalorder %s88, %s89
      %p100 = scmp.eq.s32.totalorder %s22, 0
      %p101 = por %p99, %p100
      %p102 = scmp.ne.s32.totalorder %s88, %s89
      %p103 = scmp.eq.s32.totalorder %s23, 1
      %p104 = por %p102, %p103
      %p106 = scmp.ne.s32.totalorder %s89, %s105
      %p107 = scmp.eq.s32.totalorder %s23, 0
      %p108 = por %p106, %p107
      %p109 = scmp.le.s32.totalorder 1, %s17
      %p110 = scmp.lt.s32.totalorder %s17, 3
      %p111 = pnand %p109, %p110
      %p112 = pneg %p111
      // Predicated region
      $region9: #{tpu_custom_call.1} parent=5 // pred_check
        _
      $region10: #{tpu_custom_call.1} parent=5 // pred_check_branch
        %114 = sbr.rel (%p111) target = $region12
      $region11: #{tpu_custom_call.1} parent=5 // pred_region
        %s115 = ssub.s32 %s17, 1
      $region12: #{tpu_custom_call.1} parent=5 // pred_fallthru
        _
      %p116 = scmp.lt.s32.totalorder %s17, 2
      // Predicated region
      $region13: #{tpu_custom_call.1} parent=5 // pred_check
        %p117 = pneg %p116
      $region14: #{tpu_custom_call.1} parent=5 // pred_check_branch
        %119 = sbr.rel (%p117) target = $region16
      $region15: #{tpu_custom_call.1} parent=5 // pred_region
        // Predicated region
        $region17: #{tpu_custom_call.1} parent=15 // pred_check
          %p120 = pneg %p37
        $region18: #{tpu_custom_call.1} parent=15 // pred_check_branch
          %122 = sbr.rel (%p120) target = $region20
        $region19: #{tpu_custom_call.1} parent=15 // pred_region
          %s123 = sand.u32 %s27, 1
          %s124 = scalar_lea.sflag [#allocation3], %s123
          %s125 = sand.u32 %s27, 1
          %s126 = smul.addr %s125, 8
          %s127 = scalar_lea.vmem [#allocation2], %s126
          %129 = vsyncadd %s124, 0
          %s130 = smul.addr %s17, 8
          %s131 = scalar_lea.hbm %s0, %s130
          %s133 = sshll.u32 %s131, 4
          %s134 = int_to_ptr.hbm [resolvable:$true] %s133
          %s135 = sshll.u32 %s127, 4
          %s136 = int_to_ptr.vmem [resolvable:$true] %s135
          %138 = dma.hbm_to_vmem [thread:$0]  %s134, 128, %s136, %s124
        $region20: #{tpu_custom_call.1} parent=15 // pred_fallthru
          _
        // Predicated region
        $region21: #{tpu_custom_call.1} parent=15 // pred_check
          %p139 = pneg %p69
        $region22: #{tpu_custom_call.1} parent=15 // pred_check_branch
          %141 = sbr.rel (%p139) target = $region24
        $region23: #{tpu_custom_call.1} parent=15 // pred_region
          %s142 = sand.u32 %s59, 1
          %s143 = scalar_lea.sflag [#allocation6], %s142
          %s144 = sand.u32 %s59, 1
          %s145 = smul.addr %s144, 8
          %s146 = scalar_lea.vmem [#allocation5], %s145
          %s147 = sadd.s32 %s17, 1
          %p148 = scmp.lt.s32.totalorder %s147, 1
          %s149 = scalar_select %p148, %s147, 1
          %151 = vsyncadd %s143, 0
          %s152 = smul.addr %s149, 8
          %s153 = scalar_lea.hbm %s1, %s152
          %s155 = sshll.u32 %s153, 4
          %s156 = int_to_ptr.hbm [resolvable:$true] %s155
          %s157 = sshll.u32 %s146, 4
          %s158 = int_to_ptr.vmem [resolvable:$true] %s157
          %160 = dma.hbm_to_vmem [thread:$0]  %s156, 128, %s158, %s143
        $region24: #{tpu_custom_call.1} parent=15 // pred_fallthru
          _
      $region16: #{tpu_custom_call.1} parent=5 // pred_fallthru
        _
      %p161 = scmp.le.s32.totalorder 1, %s17
      %p162 = scmp.lt.s32.totalorder %s17, 3
      %p163 = pnand %p161, %p162
      %p164 = pneg %p163
      // Predicated region
      $region25: #{tpu_custom_call.1} parent=5 // pred_check
        _
      $region26: #{tpu_custom_call.1} parent=5 // pred_check_branch
        %166 = sbr.rel (%p163) target = $region28
      $region27: #{tpu_custom_call.1} parent=5 // pred_region
        %s167 = ssub.s32 %s17, 1
        %s168 = sand.u32 %s30, 1
        %s169 = scalar_lea.sflag [#allocation3], %s168
        %s170 = sand.u32 %s30, 1
        %s171 = smul.addr %s170, 8
        %s172 = scalar_lea.vmem [#allocation2], %s171
        // Predicated region
        $region29: #{tpu_custom_call.1} parent=27 // pred_check
          %p173 = pneg %p43
        $region30: #{tpu_custom_call.1} parent=27 // pred_check_branch
          %175 = sbr.rel (%p173) target = $region32
        $region31: #{tpu_custom_call.1} parent=27 // pred_region
          %177 = dma.done %s169, 128
        $region32: #{tpu_custom_call.1} parent=27 // pred_fallthru
          _
        %s178 = sand.u32 %s62, 1
        %s179 = scalar_lea.sflag [#allocation6], %s178
        %s180 = sand.u32 %s62, 1
        %s181 = smul.addr %s180, 8
        %s182 = scalar_lea.vmem [#allocation5], %s181
        // Predicated region
        $region33: #{tpu_custom_call.1} parent=27 // pred_check
          %p183 = pneg %p75
        $region34: #{tpu_custom_call.1} parent=27 // pred_check_branch
          %185 = sbr.rel (%p183) target = $region36
        $region35: #{tpu_custom_call.1} parent=27 // pred_region
          %187 = dma.done %s179, 128
        $region36: #{tpu_custom_call.1} parent=27 // pred_fallthru
          _
        %s188 = sand.u32 %s30, 1
        %s189 = scalar_lea.sflag [#allocation3], %s188
        %s190 = sand.u32 %s30, 1
        %s191 = smul.addr %s190, 8
        %s192 = scalar_lea.vmem [#allocation2], %s191
        %p193 = pneg %p43
        %p194 = pneg %p40
        %s195 = sand.u32 %s62, 1
        %s196 = scalar_lea.sflag [#allocation6], %s195
        %s197 = sand.u32 %s62, 1
        %s198 = smul.addr %s197, 8
        %s199 = scalar_lea.vmem [#allocation5], %s198
        %p200 = pneg %p75
        %p201 = pneg %p72
        %p202 = pneg %p101
        %p203 = pneg %p98
        %s204 = sand.u32 %s88, 1
        %s205 = scalar_lea.sflag [#allocation4], %s204
        %s206 = sand.u32 %s88, 1
        %s207 = smul.addr %s206, 8
        %s208 = scalar_lea.vmem [#allocation7], %s207
        %s209 = sadd.s32 %s22, 1
        %p210 = scmp.lt.s32.totalorder %s209, 1
        %s211 = scalar_select %p210, %s209, 1
        %v212 = vld [vmem:[%s172] sm:$0xff]
        %v213 = vld [vmem:[%s182] sm:$0x1]
        %v214 = vld [vmem:[%s182 + $0x1] sm:$0x1]
        %v215 = vlaneseq
        %v216 = vshrl.u32 %v215, 7
        %vm217 = vcmp.eq.s32.totalorder %v216, 7
        %v218 = vrot.slane %v212, 1
        %v219 = vperm.slane %v213, 0
        %v220 = vsel %vm217, %v219, %v218
        %v221 = vrot.slane %v220, 1
        %v222 = vperm.slane %v214, 0
        %v223 = vsel %vm217, %v222, %v221
        %v224 = vmin.f32 %v212, %v220
        %v225 = vmax.f32 %v212, %v220
        %v226 = vmin.f32 %v224, %v223
        %v227 = vmin.f32 %v225, %v223
        %v228 = vmax.f32 %v224, %v227
        %v229 = vmax.f32 %v225, %v223
        %230 = vrot.lane.b32.xlu0 %v226, 124
        %v231 = vpop.permute.xlu0 %230
        %232 = vrot.lane.b32.xlu0 %v226, 120
        %v233 = vpop.permute.xlu0 %232
        %v234 = vmax.f32 %v231, %v233
        %v235 = vmax.f32 %v234, %v226
        %236 = vrot.lane.b32.xlu0 %v229, 124
        %v237 = vpop.permute.xlu0 %236
        %238 = vrot.lane.b32.xlu0 %v229, 120
        %v239 = vpop.permute.xlu0 %238
        %v240 = vmin.f32 %v237, %v239
        %v241 = vmin.f32 %v240, %v229
        %242 = vrot.lane.b32.xlu0 %v228, 124
        %v243 = vpop.permute.xlu0 %242
        %244 = vrot.lane.b32.xlu0 %v228, 120
        %v245 = vpop.permute.xlu0 %244
        %v246 = vmin.f32 %v243, %v245
        %v247 = vmax.f32 %v243, %v245
        %v248 = vmin.f32 %v247, %v228
        %v249 = vmax.f32 %v246, %v248
        %v250 = vmin.f32 %v235, %v249
        %v251 = vmax.f32 %v235, %v249
        %v252 = vmin.f32 %v251, %v241
        %v253 = vmax.f32 %v250, %v252
        %vm254 = vcmask 457728
        %255 = vst.msk [vmem:[%s208] sm:$0xff] %vm254, %v253
        %s256 = sand.u32 %s88, 1
        %s257 = scalar_lea.sflag [#allocation4], %s256
        %s258 = sand.u32 %s88, 1
        %s259 = smul.addr %s258, 8
        %s260 = scalar_lea.vmem [#allocation7], %s259
        // Predicated region
        $region37: #{tpu_custom_call.1} parent=27 // pred_check
          %p261 = pneg %p98
        $region38: #{tpu_custom_call.1} parent=27 // pred_check_branch
          %263 = sbr.rel (%p261) target = $region40
        $region39: #{tpu_custom_call.1} parent=27 // pred_region
          %265 = vsyncadd %s257, 0
          %s266 = smul.addr %s22, 8
          %s267 = scalar_lea.hbm %s2, %s266
          %s269 = sshll.u32 %s260, 4
          %s270 = int_to_ptr.vmem [resolvable:$true] %s269
          %s271 = sshll.u32 %s267, 4
          %s272 = int_to_ptr.hbm [resolvable:$true] %s271
          %274 = dma.vmem_to_hbm [thread:$0]  %s270, 128, %s272, %s257
        $region40: #{tpu_custom_call.1} parent=27 // pred_fallthru
          _
      $region28: #{tpu_custom_call.1} parent=5 // pred_fallthru
        _
      %p275 = scmp.le.s32.totalorder 2, %s17
      // Predicated region
      $region41: #{tpu_custom_call.1} parent=5 // pred_check
        %p276 = pneg %p275
      $region42: #{tpu_custom_call.1} parent=5 // pred_check_branch
        %278 = sbr.rel (%p276) target = $region44
      $region43: #{tpu_custom_call.1} parent=5 // pred_region
        %s279 = ssub.s32 %s17, 2
        // Predicated region
        $region45: #{tpu_custom_call.1} parent=43 // pred_check
          %p280 = pneg %p104
        $region46: #{tpu_custom_call.1} parent=43 // pred_check_branch
          %282 = sbr.rel (%p280) target = $region48
        $region47: #{tpu_custom_call.1} parent=43 // pred_region
          %s283 = sand.u32 %s89, 1
          %s284 = scalar_lea.sflag [#allocation4], %s283
          %s285 = sand.u32 %s89, 1
          %s286 = smul.addr %s285, 8
          %s287 = scalar_lea.vmem [#allocation7], %s286
          %289 = dma.done %s284, 128
        $region48: #{tpu_custom_call.1} parent=43 // pred_fallthru
          _
      $region44: #{tpu_custom_call.1} parent=5 // pred_fallthru
        _
    $region6: #{tpu_custom_call.1} parent=1 // loop_footer
      %s21 = sadd.s32 1, %s17
    $region7: #{tpu_custom_call.1} parent=1 // loop_footer_branch
      %16 = sbr.rel target = $region3
    $region8: #{tpu_custom_call.1} parent=1 // loop_exit
      _
    %290 = vsyncpa [#allocation3], 1
    %s291 = scalar_lea.sflag [#allocation3], 1
    %292 = vsyncpa %s291, 1
    %293 = vsyncpa [#allocation6], 1
    %s294 = scalar_lea.sflag [#allocation6], 1
    %295 = vsyncpa %s294, 1
    %296 = vsyncpa [#allocation4], 1
    %s297 = scalar_lea.sflag [#allocation4], 1
    %298 = vsyncpa %s297, 1

</llo_original>
